<compile_context>
chip_gen: v7x
topology: tpu7x:2x2x1
jax: 0.10.0
libtpu: 0.0.40
codegen_flags: <defaults>
</compile_context>

<pallas_src>
import functools

import jax
import jax.numpy as jnp
from jax import lax
from jax.experimental import pallas as pl
from jax.experimental.pallas import tpu as pltpu


# ----------------------------------------------------------------------------
# Kernel 1: vertex transform (world -> cam -> OpenGL -> screen), SoA layout
# ----------------------------------------------------------------------------
def _transform_kernel(cam_ref, v_ref, vview_ref, vscr_ref, *, inv_scale):
    b = pl.program_id(0)
    vx = v_ref[0, 0:1, :]                     # (1, V)  world-space x
    vy = v_ref[0, 1:2, :]
    vz = v_ref[0, 2:3, :]

    # camera params in SMEM: 9 rotation + 3 translation + 4 intrinsics.
    r00 = cam_ref[b, 0]; r01 = cam_ref[b, 1]; r02 = cam_ref[b, 2]
    r10 = cam_ref[b, 3]; r11 = cam_ref[b, 4]; r12 = cam_ref[b, 5]
    r20 = cam_ref[b, 6]; r21 = cam_ref[b, 7]; r22 = cam_ref[b, 8]
    tx = cam_ref[b, 9]; ty = cam_ref[b, 10]; tz = cam_ref[b, 11]
    fx = cam_ref[b, 12]; fy = cam_ref[b, 13]; cx = cam_ref[b, 14]; cy = cam_ref[b, 15]

    # world_to_cam (PyTorch3D row-vector convention): cam = v @ R + T
    camx = vx * r00 + vy * r10 + vz * r20 + tx
    camy = vx * r01 + vy * r11 + vz * r21 + ty
    camz = vx * r02 + vy * r12 + vz * r22 + tz

    # cam_to_opengl (flip x, y) + z / rasterizer.scale
    x = -camx
    y = -camy
    z = camz * inv_scale

    # 1/z on the EUP (approx) + one Newton step for ~full f32 accuracy.
    inv_z = pl.reciprocal(z, approx=True)
    inv_z = inv_z * (2.0 - z * inv_z)
    xs = fx * x * inv_z + cx
    ys = fy * y * inv_z + cy

    # direct row stores (no sublane concat)
    vview_ref[0, 0:1, :] = x
    vview_ref[0, 1:2, :] = y
    vview_ref[0, 2:3, :] = z
    vview_ref[0, 3:4, :] = jnp.ones_like(x)
    vscr_ref[0, 0:1, :] = xs
    vscr_ref[0, 1:2, :] = ys
    vscr_ref[0, 2:3, :] = z


def transform_verts(cam, verts_soa, raster_scale):
    # TODO(synk): for very large V, tile the vertex axis (block (1,3,TILE_V));
    # kept full-V here since the transform is tiny / memory bound.
    B, _, V = verts_soa.shape
    kernel = functools.partial(_transform_kernel,
                               inv_scale=1.0 / float(raster_scale))
    out_shape = (
        jax.ShapeDtypeStruct((B, 4, V), jnp.float32),   # verts_view_cat (x,y,z,1)
        jax.ShapeDtypeStruct((B, 3, V), jnp.float32),   # verts_screen  (xs,ys,z)
    )
    return pl.pallas_call(
        kernel,
        out_shape=out_shape,
        grid_spec=pltpu.PrefetchScalarGridSpec(
            num_scalar_prefetch=0,
            grid=(B,),
            in_specs=[
                pl.BlockSpec(memory_space=pltpu.MemorySpace.SMEM),   # cam (B, 16)
                pl.BlockSpec((1, 3, V), lambda b: (b, 0, 0)),
            ],
            out_specs=[
                pl.BlockSpec((1, 4, V), lambda b: (b, 0, 0)),
                pl.BlockSpec((1, 3, V), lambda b: (b, 0, 0)),
            ],
        ),
        compiler_params=pltpu.CompilerParams(dimension_semantics=("parallel",)),
    )(cam, verts_soa)


# ----------------------------------------------------------------------------
# Kernel 2: fused rasterizer (K-layer depth peeling) + soft-blend shader
# ----------------------------------------------------------------------------
def _raster_shade_kernel(pxy_ref, coef_ref, fcol_ref, fused_ref, p2f_ref,
                         *, F_valid, num_layers, blend_sigma, idx_bits, C):
    b = pl.program_id(0)
    Fp = coef_ref.shape[1]
    TILE = fused_ref.shape[2]
    BIGF = jnp.float32(3.0e38)
    low_mask = (1 << idx_bits) - 1

    # per-face plane coefficients, (Fp, 1) columns broadcast along pixel lanes
    A0 = coef_ref[0, :, 0:1]; B0 = coef_ref[0, :, 1:2]; C0 = coef_ref[0, :, 2:3]
    A1 = coef_ref[0, :, 3:4]; B1 = coef_ref[0, :, 4:5]; C1 = coef_ref[0, :, 5:6]
    Az = coef_ref[0, :, 6:7]; Bz = coef_ref[0, :, 7:8]; Cz = coef_ref[0, :, 8:9]

    # pixel centres for this tile (precomputed host-side), (1, TILE)
    px = pxy_ref[0:1, :]
    py = pxy_ref[1:2, :]

    # plane evaluations (1/d and validity already folded into the coeffs;
    # invalid / padded faces have w0 == -1 everywhere -> culled by `inside`)
    w0 = A0 * px + B0 * py + C0                       # (Fp, TILE)
    w1 = A1 * px + B1 * py + C1
    w2 = 1.0 - w0 - w1
    zf = Az * px + Bz * py + Cz
    inside = (w0 >= 0.0) & (w1 >= 0.0) & (w2 >= 0.0)

    # packed sortable key: positive-f32 bit pattern with the low mantissa bits
    # replaced by the face index; float ordering == (z, face_index) ordering.
    fidx = lax.broadcasted_iota(jnp.int32, (Fp, TILE), 0)
    zbits = pltpu.bitcast(zf, jnp.int32)
    keyi = (zbits & jnp.int32(~low_mask)) | fidx
    key = jnp.where(inside, pltpu.bitcast(keyi, jnp.float32), BIGF)

    # fused f32 output row offsets
    opa_row = C
    tw_row = C + 1
    zb_row = C + 1 + num_layers
    by_row = C + 1 + 2 * num_layers

    M = jnp.zeros((Fp, TILE), jnp.float32)      # combined disjoint layer-weight mask
    wsum = jnp.full((1, TILE), 1e-10, jnp.float32)
    z_near = None
    hit0 = None
    face_off = b * F_valid

    # --- K-layer depth peeling; per layer one (Fp,TILE) min + two masked sums.
    for k in range(num_layers):
        kmin = jnp.min(key, axis=0, keepdims=True)               # (1, TILE)
        hit = kmin < BIGF * 0.5
        onehot = key == kmin                                     # (Fp, TILE)
        key = jnp.where(onehot, BIGF, key)                       # peel selected face

        kb = pltpu.bitcast(kmin, jnp.int32)
        idx = kb & jnp.int32(low_mask)                           # argmin face index
        zmin = pltpu.bitcast(kb & jnp.int32(~low_mask), jnp.float32)

        if k == 0:
            z_near = zmin
            hit0 = hit
        wraw = jnp.where(hit, jnp.exp((z_near - zmin) * blend_sigma), 0.0)
        wsum = wsum + wraw
        M = M + jnp.where(onehot, wraw, 0.0)

        b0 = jnp.sum(jnp.where(onehot, w0, 0.0), axis=0, keepdims=True)
        b1 = jnp.sum(jnp.where(onehot, w1, 0.0), axis=0, keepdims=True)
        b2 = 1.0 - b0 - b1                                       # valid under `hit`

        # lane-dense per-layer row stores (no lists, no trailing concats)
        p2f_ref[0, k:k + 1, :] = jnp.where(hit, idx + face_off, -1)
        fused_ref[0, tw_row + k:tw_row + k + 1, :] = wraw        # normalized below
        fused_ref[0, zb_row + k:zb_row + k + 1, :] = jnp.where(hit, zmin, -1.0)
        fused_ref[0, by_row + 3 * k + 0:by_row + 3 * k + 1, :] = jnp.where(hit, b0, -1.0)
        fused_ref[0, by_row + 3 * k + 1:by_row + 3 * k + 2, :] = jnp.where(hit, b1, -1.0)
        fused_ref[0, by_row + 3 * k + 2:by_row + 3 * k + 3, :] = jnp.where(hit, b2, -1.0)

    inv_wsum = pl.reciprocal(wsum, approx=True)                  # (1, TILE), EUP

    # --- fused per-vertex-feature interpolation over all layers (MXU filler):
    #     img[ch, p] = sum_f (M*w0)[f,p]*c0[ch,f] + (M*w1)*c1 + (M*w2)*c2
    Mw0 = M * w0
    Mw1 = M * w1
    Mw2 = M - Mw0 - Mw1
    fc = fcol_ref[0]                                             # (3, C, Fp)
    dn = (((1,), (0,)), ((), ()))
    img = (lax.dot_general(fc[0], Mw0, dn, preferred_element_type=jnp.float32)
           + lax.dot_general(fc[1], Mw1, dn, preferred_element_type=jnp.float32)
           + lax.dot_general(fc[2], Mw2, dn, preferred_element_type=jnp.float32))

    fused_ref[0, 0:C, :] = img * inv_wsum                        # images (C, TILE)
    fused_ref[0, opa_row:opa_row + 1, :] = hit0.astype(jnp.float32)
    # normalize texel weights in place (read-modify-write of the output tile)
    tw = fused_ref[0, tw_row:tw_row + num_layers, :]
    fused_ref[0, tw_row:tw_row + num_layers, :] = tw * inv_wsum


def _pick_pixel_tile(hw, fp, max_tile=512, vmem_budget_bytes=24 * 1024 * 1024):
    # ~10 live (Fp, TILE) f32 intermediates in the kernel; size TILE so they fit
    # the VMEM budget on every chip (v7x has only 64 MiB/TC).
    cap = vmem_budget_bytes // max(1, 10 * fp * 4)
    cap = min(max_tile, cap)
    cap = max(128, (cap // 128) * 128)
    best = None
    t = 128
    while t <= min(hw, cap):
        if hw % t == 0:
            best = t
        t += 128
    if best is None:
        best = hw           # full-extent block is always legal
    return best


def rasterize_and_shade(pix_xy, face_coef, face_col, *, tile, F_valid,
                        num_layers, blend_sigma):
    B, Fp, _ = face_coef.shape
    C = face_col.shape[2]
    HW = pix_xy.shape[1]
    n_tiles = HW // tile
    rows = C + 1 + 5 * num_layers
    idx_bits = max(7, (Fp - 1).bit_length())

    kernel = functools.partial(_raster_shade_kernel, F_valid=F_valid,
                               num_layers=num_layers,
                               blend_sigma=float(blend_sigma),
                               idx_bits=idx_bits, C=C)
    out_shape = (
        jax.ShapeDtypeStruct((B, rows, HW), jnp.float32),           # fused f32 rows
        jax.ShapeDtypeStruct((B, num_layers, HW), jnp.int32),       # pix_to_face
    )
    return pl.pallas_call(
        kernel,
        out_shape=out_shape,
        grid_spec=pltpu.PrefetchScalarGridSpec(
            num_scalar_prefetch=0,
            grid=(B, n_tiles),
            in_specs=[
                pl.BlockSpec((2, tile), lambda b, t: (0, t)),            # pixel coords
                pl.BlockSpec((1, Fp, 9), lambda b, t: (b, 0, 0)),        # face plane coeffs
                pl.BlockSpec((1, 3, C, Fp), lambda b, t: (b, 0, 0, 0)),  # face colors
            ],
            out_specs=[
                pl.BlockSpec((1, rows, tile), lambda b, t: (b, 0, t)),
                pl.BlockSpec((1, num_layers, tile), lambda b, t: (b, 0, t)),
            ],
        ),
        compiler_params=pltpu.CompilerParams(
            dimension_semantics=("parallel", "parallel"),
            vmem_limit_bytes=32 * 1024 * 1024),
    )(pix_xy, face_coef, face_col)


# ----------------------------------------------------------------------------
# Python wrapper == RendererMeshLayers.forward
# ----------------------------------------------------------------------------
def renderer_mesh_layers_forward(R, T, intr, verts, faces, verts_rgb, *,
                                 num_layers, image_size, raster_scale=1.0,
                                 blend_sigma=4.0, near=1e-6, pixel_tile=None):
    B, V, _ = verts.shape
    H, W = image_size
    HW = H * W
    F = faces.shape[1]
    K = num_layers
    C = verts_rgb.shape[-1]

    # --- _build_and_transform (Pallas kernel 1, SoA lane-dense) ---
    verts_soa = jnp.transpose(verts.astype(jnp.float32), (0, 2, 1))       # (B,3,V)
    cam = jnp.concatenate([R.reshape(B, 9), T.reshape(B, 3),
                           intr.reshape(B, 4)], axis=-1).astype(jnp.float32)
    vview_cat_soa, vscr_soa = transform_verts(cam, verts_soa, raster_scale)
    verts_view_cat = jnp.transpose(vview_cat_soa, (0, 2, 1))              # (B,V,4)
    verts_screen = jnp.transpose(vscr_soa, (0, 2, 1))                     # (B,V,3)

    # --- host-side per-face plane coefficients (glue; cheap XLA gathers) ---
    faces0 = faces[0]
    v0 = jnp.take(verts_screen, faces0[:, 0], axis=1)                     # (B,F,3)
    v1 = jnp.take(verts_screen, faces0[:, 1], axis=1)
    v2 = jnp.take(verts_screen, faces0[:, 2], axis=1)
    ax, ay, az = v0[..., 0], v0[..., 1], v0[..., 2]
    bx, by, bz = v1[..., 0], v1[..., 1], v1[..., 2]
    cx, cy, cz = v2[..., 0], v2[..., 1], v2[..., 2]
    d = (by - cy) * (ax - cx) + (cx - bx) * (ay - cy)
    face_ok = (jnp.abs(d) >= 1e-8) & (az > near) & (bz > near) & (cz > near)
    inv_d = jnp.where(face_ok, 1.0 / jnp.where(face_ok, d, 1.0), 0.0)

    def _ok(x, fill=0.0):          # sanitize: invalid faces get finite coeffs
        return jnp.where(face_ok, x, fill)

    A0 = _ok((by - cy) * inv_d)
    B0 = _ok((cx - bx) * inv_d)
    C0 = _ok(-(A0 * cx + B0 * cy), -1.0)     # -1 => w0 < 0 => invalid face culled
    A1 = _ok((cy - ay) * inv_d)
    B1 = _ok((ax - cx) * inv_d)
    C1 = _ok(-(A1 * cx + B1 * cy))
    Az = _ok(A0 * (az - cz) + A1 * (bz - cz))
    Bz = _ok(B0 * (az - cz) + B1 * (bz - cz))
    Cz = _ok(C0 * (az - cz) + C1 * (bz - cz) + cz)

    Fp = ((F + 127) // 128) * 128
    face_coef = jnp.stack([A0, B0, C0, A1, B1, C1, Az, Bz, Cz], axis=-1)  # (B,F,9)
    face_coef = jnp.pad(face_coef.astype(jnp.float32),
                        ((0, 0), (0, Fp - F), (0, 0)))
    if Fp > F:                                   # padded faces: force w0 = -1
        face_coef = face_coef.at[:, F:, 2].set(-1.0)

    fl = faces0.reshape(-1)
    face_col = jnp.take(verts_rgb.astype(jnp.float32), fl, axis=1)
    face_col = jnp.transpose(face_col.reshape(B, F, 3, C), (0, 2, 3, 1))  # (B,3,C,F)
    face_col = jnp.pad(face_col, ((0, 0), (0, 0), (0, 0), (0, Fp - F)))   # (B,3,C,Fp)

    # pixel-centre coordinates (computed in XLA; avoids in-kernel int div)
    ii = jnp.arange(HW, dtype=jnp.int32)
    pix_xy = jnp.stack([(ii % W).astype(jnp.float32) + 0.5,
                        (ii // W).astype(jnp.float32) + 0.5], axis=0)     # (2, HW)

    tile = pixel_tile if pixel_tile is not None else _pick_pixel_tile(HW, Fp)
    assert HW % tile == 0, "pixel tile must divide H*W"

    # --- _rasterize + shader (fused Pallas kernel 2) ---
    fused, p2f_f = rasterize_and_shade(
        pix_xy, face_coef, face_col, tile=tile, F_valid=F,
        num_layers=K, blend_sigma=blend_sigma)

    # kernel already produced NCHW-style lane-dense layouts: slices + reshapes
    images = fused[:, 0:C, :].reshape(B, C, H, W)
    opacity = fused[:, C:C + 1, :].reshape(B, 1, H, W)
    texel_weights = fused[:, C + 1:C + 1 + K, :].reshape(B, K, H, W)
    zbuf_rows = fused[:, C + 1 + K:C + 1 + 2 * K, :].reshape(B, K, H, W)
    bary_rows = fused[:, C + 1 + 2 * K:C + 1 + 5 * K, :].reshape(B, K, 3, H, W)

    pix_to_face = jnp.transpose(p2f_f.reshape(B, K, H, W), (0, 2, 3, 1))
    zbuf = jnp.transpose(zbuf_rows, (0, 2, 3, 1))
    bary = jnp.transpose(bary_rows, (0, 3, 4, 1, 2))

    # nvdiffrast-style rast_out for the nearest layer: (u, v, z, face_id + 1)
    rast_out = jnp.concatenate(
        [bary[..., 0, 0:1], bary[..., 0, 1:2], zbuf[..., 0:1],
         (pix_to_face[..., 0:1] + 1).astype(jnp.float32)], axis=-1)

    return {
        'images': images,                                # B x C x H x W
        'opacity': opacity,                              # B x 1 x H x W
        'texel_weights': texel_weights,                  # B x N x H x W
        'fragments': {
            'pix_to_face': pix_to_face,                  # B x H x W x K (int32)
            'zbuf': zbuf,                                # B x H x W x K
            'bary_coords': bary,                         # B x H x W x K x 3
            'ffrast_rast_out': rast_out,                 # B x H x W x 4
        },
        'verts_view_cat': verts_view_cat,                # B x V x 4
    }


if __name__ == "__main__":
    key = jax.random.PRNGKey(0)
    B, V, F, C, H, W, K = 2, 8, 12, 4, 16, 16, 2
    k1, k2, k3 = jax.random.split(key, 3)

    verts = jax.random.uniform(k1, (B, V, 3), minval=-1.0, maxval=1.0)
    verts = verts.at[:, :, 2].multiply(0.4)                       # keep in front of cam
    faces = jax.random.randint(k2, (B, F, 3), 0, V)
    verts_rgb = jax.random.uniform(k3, (B, V, C))                 # per-vertex "texture"

    R = jnp.tile(jnp.eye(3, dtype=jnp.float32)[None], (B, 1, 1))  # world->cam rotation
    T = jnp.tile(jnp.array([[0.0, 0.0, 2.5]], jnp.float32), (B, 1))
    intr = jnp.tile(jnp.array([[20.0, 20.0, 8.0, 8.0]], jnp.float32), (B, 1))

    out = renderer_mesh_layers_forward(R, T, intr, verts, faces, verts_rgb,
                                       num_layers=K, image_size=(H, W),
                                       raster_scale=1.0, pixel_tile=128)
    jax.block_until_ready(out)

    assert out['images'].shape == (B, C, H, W)
    assert out['opacity'].shape == (B, 1, H, W)
    assert out['texel_weights'].shape == (B, K, H, W)
    assert out['fragments']['pix_to_face'].shape == (B, H, W, K)
    assert out['fragments']['zbuf'].shape == (B, H, W, K)
    assert out['fragments']['bary_coords'].shape == (B, H, W, K, 3)
    assert out['fragments']['ffrast_rast_out'].shape == (B, H, W, 4)
    assert out['verts_view_cat'].shape == (B, V, 4)
    assert bool(jnp.all(jnp.isfinite(out['images'])))
    print("KERNEL_OK")
</pallas_src>

<mosaic_0001>
module attributes {stable_mosaic.version = 11 : i64} {
  func.func @_transform_kernel(%arg0: i32, %arg1: memref<2x16xf32, #tpu.memory_space<smem>>, %arg2: memref<1x3x8xf32, #tpu.memory_space<vmem>>, %arg3: memref<1x4x8xf32, #tpu.memory_space<vmem>>, %arg4: memref<1x3x8xf32, #tpu.memory_space<vmem>>) attributes {dimension_semantics = [#tpu.dimension_semantics<parallel>], iteration_bounds = array<i64: 2>, scalar_prefetch = 0 : i64, scratch_operands = 0 : i64, tpu.core_type = #tpu.core_type<tc>, window_params = [{transform_indices = @transform_0, window_bounds = array<i64: 2, 16>}, {transform_indices = @transform_1, window_bounds = array<i64: 1, 3, 8>}, {transform_indices = @transform_2, window_bounds = array<i64: 1, 4, 8>}, {transform_indices = @transform_3, window_bounds = array<i64: 1, 3, 8>}]} {
    %c0 = arith.constant 0 : index
    %c0_0 = arith.constant 0 : index
    %c0_1 = arith.constant 0 : index
    %0 = vector.load %arg2[%c0, %c0_0, %c0_1] : memref<1x3x8xf32, #tpu.memory_space<vmem>>, vector<1x1x8xf32>
    %1 = vector.shape_cast %0 : vector<1x1x8xf32> to vector<1x8xf32>
    %c0_2 = arith.constant 0 : index
    %c1 = arith.constant 1 : index
    %c0_3 = arith.constant 0 : index
    %2 = vector.load %arg2[%c0_2, %c1, %c0_3] : memref<1x3x8xf32, #tpu.memory_space<vmem>>, vector<1x1x8xf32>
    %3 = vector.shape_cast %2 : vector<1x1x8xf32> to vector<1x8xf32>
    %c0_4 = arith.constant 0 : index
    %c2 = arith.constant 2 : index
    %c0_5 = arith.constant 0 : index
    %4 = vector.load %arg2[%c0_4, %c2, %c0_5] : memref<1x3x8xf32, #tpu.memory_space<vmem>>, vector<1x1x8xf32>
    %5 = vector.shape_cast %4 : vector<1x1x8xf32> to vector<1x8xf32>
    %6 = arith.index_cast %arg0 : i32 to index
    %c0_6 = arith.constant 0 : index
    %7 = memref.load %arg1[%6, %c0_6] : memref<2x16xf32, #tpu.memory_space<smem>>
    %8 = arith.index_cast %arg0 : i32 to index
    %c1_7 = arith.constant 1 : index
    %9 = memref.load %arg1[%8, %c1_7] : memref<2x16xf32, #tpu.memory_space<smem>>
    %10 = arith.index_cast %arg0 : i32 to index
    %c2_8 = arith.constant 2 : index
    %11 = memref.load %arg1[%10, %c2_8] : memref<2x16xf32, #tpu.memory_space<smem>>
    %12 = arith.index_cast %arg0 : i32 to index
    %c3 = arith.constant 3 : index
    %13 = memref.load %arg1[%12, %c3] : memref<2x16xf32, #tpu.memory_space<smem>>
    %14 = arith.index_cast %arg0 : i32 to index
    %c4 = arith.constant 4 : index
    %15 = memref.load %arg1[%14, %c4] : memref<2x16xf32, #tpu.memory_space<smem>>
    %16 = arith.index_cast %arg0 : i32 to index
    %c5 = arith.constant 5 : index
    %17 = memref.load %arg1[%16, %c5] : memref<2x16xf32, #tpu.memory_space<smem>>
    %18 = arith.index_cast %arg0 : i32 to index
    %c6 = arith.constant 6 : index
    %19 = memref.load %arg1[%18, %c6] : memref<2x16xf32, #tpu.memory_space<smem>>
    %20 = arith.index_cast %arg0 : i32 to index
    %c7 = arith.constant 7 : index
    %21 = memref.load %arg1[%20, %c7] : memref<2x16xf32, #tpu.memory_space<smem>>
    %22 = arith.index_cast %arg0 : i32 to index
    %c8 = arith.constant 8 : index
    %23 = memref.load %arg1[%22, %c8] : memref<2x16xf32, #tpu.memory_space<smem>>
    %24 = arith.index_cast %arg0 : i32 to index
    %c9 = arith.constant 9 : index
    %25 = memref.load %arg1[%24, %c9] : memref<2x16xf32, #tpu.memory_space<smem>>
    %26 = arith.index_cast %arg0 : i32 to index
    %c10 = arith.constant 10 : index
    %27 = memref.load %arg1[%26, %c10] : memref<2x16xf32, #tpu.memory_space<smem>>
    %28 = arith.index_cast %arg0 : i32 to index
    %c11 = arith.constant 11 : index
    %29 = memref.load %arg1[%28, %c11] : memref<2x16xf32, #tpu.memory_space<smem>>
    %30 = arith.index_cast %arg0 : i32 to index
    %c12 = arith.constant 12 : index
    %31 = memref.load %arg1[%30, %c12] : memref<2x16xf32, #tpu.memory_space<smem>>
    %32 = arith.index_cast %arg0 : i32 to index
    %c13 = arith.constant 13 : index
    %33 = memref.load %arg1[%32, %c13] : memref<2x16xf32, #tpu.memory_space<smem>>
    %34 = arith.index_cast %arg0 : i32 to index
    %c14 = arith.constant 14 : index
    %35 = memref.load %arg1[%34, %c14] : memref<2x16xf32, #tpu.memory_space<smem>>
    %36 = arith.index_cast %arg0 : i32 to index
    %c15 = arith.constant 15 : index
    %37 = memref.load %arg1[%36, %c15] : memref<2x16xf32, #tpu.memory_space<smem>>
    %38 = vector.broadcast %7 : f32 to vector<1x8xf32>
    %39 = arith.mulf %1, %38 : vector<1x8xf32>
    %40 = vector.broadcast %13 : f32 to vector<1x8xf32>
    %41 = arith.mulf %3, %40 : vector<1x8xf32>
    %42 = arith.addf %39, %41 : vector<1x8xf32>
    %43 = vector.broadcast %19 : f32 to vector<1x8xf32>
    %44 = arith.mulf %5, %43 : vector<1x8xf32>
    %45 = arith.addf %42, %44 : vector<1x8xf32>
    %46 = vector.broadcast %25 : f32 to vector<1x8xf32>
    %47 = arith.addf %45, %46 : vector<1x8xf32>
    %48 = vector.broadcast %9 : f32 to vector<1x8xf32>
    %49 = arith.mulf %1, %48 : vector<1x8xf32>
    %50 = vector.broadcast %15 : f32 to vector<1x8xf32>
    %51 = arith.mulf %3, %50 : vector<1x8xf32>
    %52 = arith.addf %49, %51 : vector<1x8xf32>
    %53 = vector.broadcast %21 : f32 to vector<1x8xf32>
    %54 = arith.mulf %5, %53 : vector<1x8xf32>
    %55 = arith.addf %52, %54 : vector<1x8xf32>
    %56 = vector.broadcast %27 : f32 to vector<1x8xf32>
    %57 = arith.addf %55, %56 : vector<1x8xf32>
    %58 = vector.broadcast %11 : f32 to vector<1x8xf32>
    %59 = arith.mulf %1, %58 : vector<1x8xf32>
    %60 = vector.broadcast %17 : f32 to vector<1x8xf32>
    %61 = arith.mulf %3, %60 : vector<1x8xf32>
    %62 = arith.addf %59, %61 : vector<1x8xf32>
    %63 = vector.broadcast %23 : f32 to vector<1x8xf32>
    %64 = arith.mulf %5, %63 : vector<1x8xf32>
    %65 = arith.addf %62, %64 : vector<1x8xf32>
    %66 = vector.broadcast %29 : f32 to vector<1x8xf32>
    %67 = arith.addf %65, %66 : vector<1x8xf32>
    %cst = arith.constant 0.000000e+00 : f32
    %68 = vector.broadcast %cst : f32 to vector<1x8xf32>
    %69 = arith.subf %68, %47 : vector<1x8xf32>
    %cst_9 = arith.constant 0.000000e+00 : f32
    %70 = vector.broadcast %cst_9 : f32 to vector<1x8xf32>
    %71 = arith.subf %70, %57 : vector<1x8xf32>
    %cst_10 = arith.constant 1.000000e+00 : f32
    %72 = vector.broadcast %cst_10 : f32 to vector<1x8xf32>
    %73 = arith.mulf %67, %72 : vector<1x8xf32>
    %74 = tpu.reciprocal %73 {approx = true} : vector<1x8xf32> -> vector<1x8xf32>
    %75 = arith.mulf %73, %74 : vector<1x8xf32>
    %cst_11 = arith.constant 2.000000e+00 : f32
    %76 = vector.broadcast %cst_11 : f32 to vector<1x8xf32>
    %77 = arith.subf %76, %75 : vector<1x8xf32>
    %78 = arith.mulf %74, %77 : vector<1x8xf32>
    %79 = vector.broadcast %31 : f32 to vector<1x8xf32>
    %80 = arith.mulf %79, %69 : vector<1x8xf32>
    %81 = arith.mulf %80, %78 : vector<1x8xf32>
    %82 = vector.broadcast %35 : f32 to vector<1x8xf32>
    %83 = arith.addf %81, %82 : vector<1x8xf32>
    %84 = vector.broadcast %33 : f32 to vector<1x8xf32>
    %85 = arith.mulf %84, %71 : vector<1x8xf32>
    %86 = arith.mulf %85, %78 : vector<1x8xf32>
    %87 = vector.broadcast %37 : f32 to vector<1x8xf32>
    %88 = arith.addf %86, %87 : vector<1x8xf32>
    %c0_12 = arith.constant 0 : index
    %c0_13 = arith.constant 0 : index
    %c0_14 = arith.constant 0 : index
    %89 = vector.load %arg3[%c0_12, %c0_13, %c0_14] : memref<1x4x8xf32, #tpu.memory_space<vmem>>, vector<1x1x8xf32>
    %90 = vector.shape_cast %89 : vector<1x1x8xf32> to vector<1x8xf32>
    %91 = vector.shape_cast %69 : vector<1x8xf32> to vector<1x1x8xf32>
    tpu.vector_store %arg3[%c0_12, %c0_13, %c0_14], %91 {strides = array<i32>} : memref<1x4x8xf32, #tpu.memory_space<vmem>>, vector<1x1x8xf32>,
    %c0_15 = arith.constant 0 : index
    %c1_16 = arith.constant 1 : index
    %c0_17 = arith.constant 0 : index
    %92 = vector.load %arg3[%c0_15, %c1_16, %c0_17] : memref<1x4x8xf32, #tpu.memory_space<vmem>>, vector<1x1x8xf32>
    %93 = vector.shape_cast %92 : vector<1x1x8xf32> to vector<1x8xf32>
    %94 = vector.shape_cast %71 : vector<1x8xf32> to vector<1x1x8xf32>
    tpu.vector_store %arg3[%c0_15, %c1_16, %c0_17], %94 {strides = array<i32>} : memref<1x4x8xf32, #tpu.memory_space<vmem>>, vector<1x1x8xf32>,
    %c0_18 = arith.constant 0 : index
    %c2_19 = arith.constant 2 : index
    %c0_20 = arith.constant 0 : index
    %95 = vector.load %arg3[%c0_18, %c2_19, %c0_20] : memref<1x4x8xf32, #tpu.memory_space<vmem>>, vector<1x1x8xf32>
    %96 = vector.shape_cast %95 : vector<1x1x8xf32> to vector<1x8xf32>
    %97 = vector.shape_cast %73 : vector<1x8xf32> to vector<1x1x8xf32>
    tpu.vector_store %arg3[%c0_18, %c2_19, %c0_20], %97 {strides = array<i32>} : memref<1x4x8xf32, #tpu.memory_space<vmem>>, vector<1x1x8xf32>,
    %cst_21 = arith.constant 1.000000e+00 : f32
    %98 = vector.broadcast %cst_21 : f32 to vector<1x8xf32>
    %c0_22 = arith.constant 0 : index
    %c3_23 = arith.constant 3 : index
    %c0_24 = arith.constant 0 : index
    %99 = vector.load %arg3[%c0_22, %c3_23, %c0_24] : memref<1x4x8xf32, #tpu.memory_space<vmem>>, vector<1x1x8xf32>
    %100 = vector.shape_cast %99 : vector<1x1x8xf32> to vector<1x8xf32>
    %101 = vector.shape_cast %98 : vector<1x8xf32> to vector<1x1x8xf32>
    tpu.vector_store %arg3[%c0_22, %c3_23, %c0_24], %101 {strides = array<i32>} : memref<1x4x8xf32, #tpu.memory_space<vmem>>, vector<1x1x8xf32>,
    %c0_25 = arith.constant 0 : index
    %c0_26 = arith.constant 0 : index
    %c0_27 = arith.constant 0 : index
    %102 = vector.load %arg4[%c0_25, %c0_26, %c0_27] : memref<1x3x8xf32, #tpu.memory_space<vmem>>, vector<1x1x8xf32>
    %103 = vector.shape_cast %102 : vector<1x1x8xf32> to vector<1x8xf32>
    %104 = vector.shape_cast %83 : vector<1x8xf32> to vector<1x1x8xf32>
    tpu.vector_store %arg4[%c0_25, %c0_26, %c0_27], %104 {strides = array<i32>} : memref<1x3x8xf32, #tpu.memory_space<vmem>>, vector<1x1x8xf32>,
    %c0_28 = arith.constant 0 : index
    %c1_29 = arith.constant 1 : index
    %c0_30 = arith.constant 0 : index
    %105 = vector.load %arg4[%c0_28, %c1_29, %c0_30] : memref<1x3x8xf32, #tpu.memory_space<vmem>>, vector<1x1x8xf32>
    %106 = vector.shape_cast %105 : vector<1x1x8xf32> to vector<1x8xf32>
    %107 = vector.shape_cast %88 : vector<1x8xf32> to vector<1x1x8xf32>
    tpu.vector_store %arg4[%c0_28, %c1_29, %c0_30], %107 {strides = array<i32>} : memref<1x3x8xf32, #tpu.memory_space<vmem>>, vector<1x1x8xf32>,
    %c0_31 = arith.constant 0 : index
    %c2_32 = arith.constant 2 : index
    %c0_33 = arith.constant 0 : index
    %108 = vector.load %arg4[%c0_31, %c2_32, %c0_33] : memref<1x3x8xf32, #tpu.memory_space<vmem>>, vector<1x1x8xf32>
    %109 = vector.shape_cast %108 : vector<1x1x8xf32> to vector<1x8xf32>
    %110 = vector.shape_cast %73 : vector<1x8xf32> to vector<1x1x8xf32>
    tpu.vector_store %arg4[%c0_31, %c2_32, %c0_33], %110 {strides = array<i32>} : memref<1x3x8xf32, #tpu.memory_space<vmem>>, vector<1x1x8xf32>,
    return
  }
  func.func @transform_0(%arg0: i32) -> (i32, i32) {
    %c0_i32 = arith.constant 0 : i32
    %c0_i32_0 = arith.constant 0 : i32
    %c0_i32_1 = arith.constant 0 : i32
    return %c0_i32, %c0_i32_0 : i32, i32
  }
  func.func @transform_1(%arg0: i32) -> (i32, i32, i32) {
    %c0_i32 = arith.constant 0 : i32
    %c0_i32_0 = arith.constant 0 : i32
    %c0_i32_1 = arith.constant 0 : i32
    return %arg0, %c0_i32, %c0_i32_0 : i32, i32, i32
  }
  func.func @transform_2(%arg0: i32) -> (i32, i32, i32) {
    %c0_i32 = arith.constant 0 : i32
    %c0_i32_0 = arith.constant 0 : i32
    %c0_i32_1 = arith.constant 0 : i32
    return %arg0, %c0_i32, %c0_i32_0 : i32, i32, i32
  }
  func.func @transform_3(%arg0: i32) -> (i32, i32, i32) {
    %c0_i32 = arith.constant 0 : i32
    %c0_i32_0 = arith.constant 0 : i32
    %c0_i32_1 = arith.constant 0 : i32
    return %arg0, %c0_i32, %c0_i32_0 : i32, i32, i32
  }
}

</mosaic_0001>

<llo_original>
// kernel: tpu_custom_call.1
$region0: #{tpu_custom_call.1}
  #allocation0 [shape = 'u32[]', space=smem, size = 0x4, offset = 0x4, fixed_abs, tag = 'smem constant byte address 0x4 - core index']
  #allocation1 [shape = 'u32[144,128]{1,0:T(1,128)}', space=vmem, size = 0x12000, scoped, tag = 'internal scratch']
  %s0 = inlined_call_operand.vmem [shape: f32[2,16], index: 0, kind: input, shape index: {}]
  %s1 = inlined_call_operand.vmem [shape: f32[2,3,8], index: 1, kind: input, shape index: {}]
  %s2 = inlined_call_operand.hbm [shape: f32[2,4,8], index: 2, kind: output, shape index: {0}]
  %s3 = inlined_call_operand.vmem [shape: f32[2,3,8], index: 3, kind: output, shape index: {1}]
  %4 = xla_tuple %s2, %s3
  %s5 = sld [smem:[#allocation0]]
  $region53: #{tpu_custom_call.1} parent=0
    _
  %s7 = ssub.s32 1, %s5
  %s8 = scalar_select 0, %s7, %s5
  $region1: #{tpu_custom_call.1} parent=0
    #allocation2 [shape = 'u8[1024]{0}', space=smem, size = 0x400, scoped, tag = 'input window, operand 0, single buffered']
    #allocation3 [shape = 's32[2]{0}', space=sflag, size = 0x8, scoped, tag = 'scoped memory for tpu_custom_call.1']
    #allocation4 [shape = 's32[2]{0}', space=sflag, size = 0x8, scoped, tag = 'scoped memory for tpu_custom_call.1']
    #allocation5 [shape = 'u8[4096]{0}', space=vmem, size = 0x1000, scoped, tag = 'output window, operand 0']
    %9 = vsyncpa [#allocation4], 0
    %10 = vsyncpa [#allocation3], 0
    %s11 = scalar_lea.sflag [#allocation3], 1
    %12 = vsyncpa %s11, 0
    loop: start=0, step=1, limit=4
    $region2: #{tpu_custom_call.1} parent=1 // loop_pre_header
      _
    $region3: #{tpu_custom_call.1} parent=1 // loop_header
      %s14 = sphi 0, %s18
      %p15 = scmp.ge.s32.totalorder %s14, 4
      %s22 = sphi 0, %s22
      %s24 = sphi 0, %s22
      %s25 = sphi 0, %s24
      %s39 = sphi 0, %s25
      %s45 = sphi 0, %s47
      %s48 = sphi 0, %s45
      %s49 = sphi 0, %s48
      %s65 = sphi 0, %s49
      %s71 = sphi 0, %s73
      %s74 = sphi 0, %s71
      %s75 = sphi 0, %s74
      %s91 = sphi 0, %s75
      %s97 = sphi 0, %s99
      %s100 = sphi 0, %s97
      %s101 = sphi 0, %s100
      %s117 = sphi 0, %s101
    $region4: #{tpu_custom_call.1} parent=1 // loop_header_branch
      %17 = sbr.rel (%p15) target = $region8
    $region5: #{tpu_custom_call.1} parent=1 // loop_body
      %s19 = ssub.s32 %s14, 1
      %s20 = ssub.s32 %s14, 2
      %s21 = sadd.s32 %s14, 1
      %s23 = sadd.s32 %s22, 1
      %p26 = scmp.eq.s32.totalorder %s14, 1
      %p27 = scmp.ne.s32.totalorder %s22, %s24
      %p28 = scmp.eq.s32.totalorder %s14, 0
      %p29 = por %p27, %p28
      %p30 = scmp.ne.s32.totalorder %s22, %s24
      %p31 = scmp.eq.s32.totalorder %s19, 1
      %p32 = por %p30, %p31
      %p33 = scmp.ne.s32.totalorder %s24, %s25
      %p34 = scmp.eq.s32.totalorder %s19, 0
      %p35 = por %p33, %p34
      %p36 = scmp.ne.s32.totalorder %s24, %s25
      %p37 = scmp.eq.s32.totalorder %s20, 1
      %p38 = por %p36, %p37
      %p40 = scmp.ne.s32.totalorder %s25, %s39
      %p41 = scmp.eq.s32.totalorder %s20, 0
      %p42 = por %p40, %p41
      %s43 = ssub.s32 %s14, %s21
      %p44 = scmp.eq.s32.totalorder %s43, 0
      %s46 = sadd.s32 %s45, 1
      %s47 = scalar_select %p44, %s45, %s46
      %p50 = pneg %p44
      %p51 = scmp.eq.s32.totalorder %s14, 1
      %p52 = por %p50, %p51
      %p53 = scmp.ne.s32.totalorder %s45, %s48
      %p54 = scmp.eq.s32.totalorder %s14, 0
      %p55 = por %p53, %p54
      %p56 = scmp.ne.s32.totalorder %s45, %s48
      %p57 = scmp.eq.s32.totalorder %s19, 1
      %p58 = por %p56, %p57
      %p59 = scmp.ne.s32.totalorder %s48, %s49
      %p60 = scmp.eq.s32.totalorder %s19, 0
      %p61 = por %p59, %p60
      %p62 = scmp.ne.s32.totalorder %s48, %s49
      %p63 = scmp.eq.s32.totalorder %s20, 1
      %p64 = por %p62, %p63
      %p66 = scmp.ne.s32.totalorder %s49, %s65
      %p67 = scmp.eq.s32.totalorder %s20, 0
      %p68 = por %p66, %p67
      %s69 = ssub.s32 %s14, %s21
      %p70 = scmp.eq.s32.totalorder %s69, 0
      %s72 = sadd.s32 %s71, 1
      %s73 = scalar_select %p70, %s71, %s72
      %p76 = pneg %p70
      %p77 = scmp.eq.s32.totalorder %s14, 1
      %p78 = por %p76, %p77
      %p79 = scmp.ne.s32.totalorder %s71, %s74
      %p80 = scmp.eq.s32.totalorder %s14, 0
      %p81 = por %p79, %p80
      %p82 = scmp.ne.s32.totalorder %s71, %s74
      %p83 = scmp.eq.s32.totalorder %s19, 1
      %p84 = por %p82, %p83
      %p85 = scmp.ne.s32.totalorder %s74, %s75
      %p86 = scmp.eq.s32.totalorder %s19, 0
      %p87 = por %p85, %p86
      %p88 = scmp.ne.s32.totalorder %s74, %s75
      %p89 = scmp.eq.s32.totalorder %s20, 1
      %p90 = por %p88, %p89
      %p92 = scmp.ne.s32.totalorder %s75, %s91
      %p93 = scmp.eq.s32.totalorder %s20, 0
      %p94 = por %p92, %p93
      %s95 = ssub.s32 %s14, %s21
      %p96 = scmp.eq.s32.totalorder %s95, 0
      %s98 = sadd.s32 %s97, 1
      %s99 = scalar_select %p96, %s97, %s98
      %p102 = pneg %p96
      %p103 = scmp.eq.s32.totalorder %s14, 1
      %p104 = por %p102, %p103
      %p105 = scmp.ne.s32.totalorder %s97, %s100
      %p106 = scmp.eq.s32.totalorder %s14, 0
      %p107 = por %p105, %p106
      %p108 = scmp.ne.s32.totalorder %s97, %s100
      %p109 = scmp.eq.s32.totalorder %s19, 1
      %p110 = por %p108, %p109
      %p111 = scmp.ne.s32.totalorder %s100, %s101
      %p112 = scmp.eq.s32.totalorder %s19, 0
      %p113 = por %p111, %p112
      %p114 = scmp.ne.s32.totalorder %s100, %s101
      %p115 = scmp.eq.s32.totalorder %s20, 1
      %p116 = por %p114, %p115
      %p118 = scmp.ne.s32.totalorder %s101, %s117
      %p119 = scmp.eq.s32.totalorder %s20, 0
      %p120 = por %p118, %p119
      %p121 = scmp.le.s32.totalorder 1, %s14
      %p122 = scmp.lt.s32.totalorder %s14, 3
      %p123 = pnand %p121, %p122
      %p124 = pneg %p123
      // Predicated region
      $region9: #{tpu_custom_call.1} parent=5 // pred_check
        _
      $region10: #{tpu_custom_call.1} parent=5 // pred_check_branch
        %126 = sbr.rel (%p123) target = $region12
      $region11: #{tpu_custom_call.1} parent=5 // pred_region
        %s127 = ssub.s32 %s14, 1
        // Predicated region
        $region13: #{tpu_custom_call.1} parent=11 // pred_check
          %p128 = pneg %p35
        $region14: #{tpu_custom_call.1} parent=11 // pred_check_branch
          %130 = sbr.rel (%p128) target = $region16
        $region15: #{tpu_custom_call.1} parent=11 // pred_region
          %s132 = ssub.s32 32, 32
          %133 = vsyncadd [#allocation4], %s132
          %s135 = sshll.u32 %s0, 4
          %s136 = int_to_ptr.vmem [resolvable:$true] %s135
          %138 = dma.vmem_to_smem %s136, 32, [#allocation2], [#allocation4]
        $region16: #{tpu_custom_call.1} parent=11 // pred_fallthru
          _
      $region12: #{tpu_custom_call.1} parent=5 // pred_fallthru
        _
      %p139 = scmp.lt.s32.totalorder %s14, 2
      // Predicated region
      $region17: #{tpu_custom_call.1} parent=5 // pred_check
        %p140 = pneg %p139
      $region18: #{tpu_custom_call.1} parent=5 // pred_check_branch
        %142 = sbr.rel (%p140) target = $region20
      $region19: #{tpu_custom_call.1} parent=5 // pred_region
        // Predicated region
        $region21: #{tpu_custom_call.1} parent=19 // pred_check
          %p143 = pneg %p55
        $region22: #{tpu_custom_call.1} parent=19 // pred_check_branch
          %145 = sbr.rel (%p143) target = $region24
        $region23: #{tpu_custom_call.1} parent=19 // pred_region
          %p146 = scmp.lt.s32.totalorder %s14, 1
          %s147 = scalar_select %p146, %s14, 1
          %s148 = smul.addr %s147, 4
          %s149 = scalar_lea.vmem %s1, %s148
        $region24: #{tpu_custom_call.1} parent=19 // pred_fallthru
          _
      $region20: #{tpu_custom_call.1} parent=5 // pred_fallthru
        _
      %p150 = scmp.le.s32.totalorder 1, %s14
      %p151 = scmp.lt.s32.totalorder %s14, 3
      %p152 = pnand %p150, %p151
      %p153 = pneg %p152
      // Predicated region
      $region25: #{tpu_custom_call.1} parent=5 // pred_check
        _
      $region26: #{tpu_custom_call.1} parent=5 // pred_check_branch
        %155 = sbr.rel (%p152) target = $region28
      $region27: #{tpu_custom_call.1} parent=5 // pred_region
        %s156 = ssub.s32 %s14, 1
        // Predicated region
        $region29: #{tpu_custom_call.1} parent=27 // pred_check
          %p157 = pneg %p35
        $region30: #{tpu_custom_call.1} parent=27 // pred_check_branch
          %159 = sbr.rel (%p157) target = $region32
        $region31: #{tpu_custom_call.1} parent=27 // pred_region
          %160 = dma.done [#allocation4], 32
        $region32: #{tpu_custom_call.1} parent=27 // pred_fallthru
          _
        %161 = sfence
        %p162 = pneg %p35
        %p163 = pneg %p32
        %p164 = scmp.lt.s32.totalorder %s19, 1
        %s165 = scalar_select %p164, %s19, 1
        %s166 = smul.addr %s165, 4
        %s167 = scalar_lea.vmem %s1, %s166
        %p168 = pneg %p61
        %p169 = pneg %p58
        %p170 = pneg %p87
        %p171 = pneg %p84
        %s172 = sand.u32 %s74, 1
        %s173 = scalar_lea.sflag [#allocation3], %s172
        %s174 = sand.u32 %s74, 1
        %s175 = smul.addr %s174, 4
        %s176 = scalar_lea.vmem [#allocation5], %s175
        %p177 = pneg %p113
        %p178 = pneg %p110
        %p179 = scmp.lt.s32.totalorder %s19, 1
        %s180 = scalar_select %p179, %s19, 1
        %s181 = smul.addr %s180, 4
        %s182 = scalar_lea.vmem %s3, %s181
        %p183 = scmp.lt.s32.totalorder %s19, 1
        %s184 = scalar_select %p183, %s19, 1
        %s185 = smul.addr %s184, 4
        %s186 = scalar_lea.vmem %s1, %s185
        %p187 = scmp.lt.s32.totalorder %s19, 1
        %s188 = scalar_select %p187, %s19, 1
        %s189 = smul.addr %s188, 4
        %s190 = scalar_lea.vmem %s3, %s189
        %v191 = vld [vmem:[%s186] sm:$0x1]
        %v192 = vld [vmem:[%s186 + $0x1] sm:$0x1]
        %v193 = vld [vmem:[%s186 + $0x2] sm:$0x1]
        %s194 = smul.u32 %s19, 128
        %s195 = sld [smem:[#allocation2 + %s194]]
        %s196 = sadd.s32 %s194, 1
        %s197 = sld [smem:[#allocation2 + %s196]]
        %s198 = sadd.s32 %s194, 2
        %s199 = sld [smem:[#allocation2 + %s198]]
        %s200 = sadd.s32 %s194, 3
        %s201 = sld [smem:[#allocation2 + %s200]]
        %s202 = sadd.s32 %s194, 4
        %s203 = sld [smem:[#allocation2 + %s202]]
        %s204 = sadd.s32 %s194, 5
        %s205 = sld [smem:[#allocation2 + %s204]]
        %s206 = sadd.s32 %s194, 6
        %s207 = sld [smem:[#allocation2 + %s206]]
        %s208 = sadd.s32 %s194, 7
        %s209 = sld [smem:[#allocation2 + %s208]]
        %s210 = sadd.s32 %s194, 8
        %s211 = sld [smem:[#allocation2 + %s210]]
        %s212 = sadd.s32 %s194, 9
        %s213 = sld [smem:[#allocation2 + %s212]]
        %s214 = sadd.s32 %s194, 10
        %s215 = sld [smem:[#allocation2 + %s214]]
        %s216 = sadd.s32 %s194, 11
        %s217 = sld [smem:[#allocation2 + %s216]]
        %s218 = sadd.s32 %s194, 12
        %s219 = sld [smem:[#allocation2 + %s218]]
        %s220 = sadd.s32 %s194, 13
        %s221 = sld [smem:[#allocation2 + %s220]]
        %s222 = sadd.s32 %s194, 14
        %s223 = sld [smem:[#allocation2 + %s222]]
        %s224 = sadd.s32 %s194, 15
        %s225 = sld [smem:[#allocation2 + %s224]]
        %v226 = vstv %s195
        %v227 = vmul.f32 %v191, %v226
        %v228 = vstv %s201
        %v229 = vmul.f32 %v192, %v228
        %v230 = vadd.f32 %v227, %v229
        %v231 = vstv %s207
        %v232 = vmul.f32 %v193, %v231
        %v233 = vadd.f32 %v230, %v232
        %v234 = vstv %s213
        %v235 = vadd.f32 %v233, %v234
        %v236 = vstv %s197
        %v237 = vmul.f32 %v191, %v236
        %v238 = vstv %s203
        %v239 = vmul.f32 %v192, %v238
        %v240 = vadd.f32 %v237, %v239
        %v241 = vstv %s209
        %v242 = vmul.f32 %v193, %v241
        %v243 = vadd.f32 %v240, %v242
        %v244 = vstv %s215
        %v245 = vadd.f32 %v243, %v244
        %v246 = vstv %s199
        %v247 = vmul.f32 %v191, %v246
        %v248 = vstv %s205
        %v249 = vmul.f32 %v192, %v248
        %v250 = vadd.f32 %v247, %v249
        %v251 = vstv %s211
        %v252 = vmul.f32 %v193, %v251
        %v253 = vadd.f32 %v250, %v252
        %v254 = vstv %s217
        %v255 = vadd.f32 %v253, %v254
        %v256 = vsub.f32 0.0, %v235
        %v257 = vsub.f32 0.0, %v245
        %v258 = vrcp.pop %v255
        %v259 = vmul.f32 %v255, %v258
        %v260 = vsub.f32 2.0, %v259
        %v261 = vmul.f32 %v258, %v260
        %v262 = vstv %s219
        %v263 = vmul.f32 %v262, %v256
        %v264 = vmul.f32 %v263, %v261
        %v265 = vstv %s223
        %v266 = vadd.f32 %v264, %v265
        %v267 = vstv %s221
        %v268 = vmul.f32 %v267, %v257
        %v269 = vmul.f32 %v268, %v261
        %v270 = vstv %s225
        %v271 = vadd.f32 %v269, %v270
        %vm272 = vcmask 57344
        %273 = vst.msk [vmem:[%s176] sm:$0x1] %vm272, %v256
        %274 = vst.msk [vmem:[%s176 + $0x1] sm:$0x1] %vm272, %v257
        %275 = vst.msk [vmem:[%s176 + $0x2] sm:$0x1] %vm272, %v255
        %276 = vst.msk [vmem:[%s176 + $0x3] sm:$0x1] %vm272, 1.0
        %277 = vst.msk [vmem:[%s190] sm:$0x1] %vm272, %v266
        %278 = vst.msk [vmem:[%s190 + $0x1] sm:$0x1] %vm272, %v271
        %279 = vst.msk [vmem:[%s190 + $0x2] sm:$0x1] %vm272, %v255
        %s280 = sand.u32 %s74, 1
        %s281 = scalar_lea.sflag [#allocation3], %s280
        %s282 = sand.u32 %s74, 1
        %s283 = smul.addr %s282, 4
        %s284 = scalar_lea.vmem [#allocation5], %s283
        %p285 = scmp.lt.s32.totalorder %s19, 1
        %s286 = scalar_select %p285, %s19, 1
        %s287 = smul.addr %s286, 4
        %s288 = scalar_lea.vmem %s3, %s287
        // Predicated region
        $region33: #{tpu_custom_call.1} parent=27 // pred_check
          %p289 = pneg %p84
        $region34: #{tpu_custom_call.1} parent=27 // pred_check_branch
          %291 = sbr.rel (%p289) target = $region36
        $region35: #{tpu_custom_call.1} parent=27 // pred_region
          %s293 = ssub.s32 64, 64
          %294 = vsyncadd %s281, %s293
          %s295 = smul.addr %s19, 64
          %s296 = scalar_lea.hbm %s2, %s295
          %s298 = sshll.u32 %s284, 4
          %s299 = int_to_ptr.vmem [resolvable:$true] %s298
          %301 = dma.vmem_to_hbm [thread:$0]  %s299, 64, %s296, %s281
        $region36: #{tpu_custom_call.1} parent=27 // pred_fallthru
          _
        // Predicated region
        $region37: #{tpu_custom_call.1} parent=27 // pred_check
          %p302 = pneg %p110
        $region38: #{tpu_custom_call.1} parent=27 // pred_check_branch
          %304 = sbr.rel (%p302) target = $region40
        $region39: #{tpu_custom_call.1} parent=27 // pred_region
          _
        $region40: #{tpu_custom_call.1} parent=27 // pred_fallthru
          _
      $region28: #{tpu_custom_call.1} parent=5 // pred_fallthru
        _
      %p305 = scmp.le.s32.totalorder 2, %s14
      // Predicated region
      $region41: #{tpu_custom_call.1} parent=5 // pred_check
        %p306 = pneg %p305
      $region42: #{tpu_custom_call.1} parent=5 // pred_check_branch
        %308 = sbr.rel (%p306) target = $region44
      $region43: #{tpu_custom_call.1} parent=5 // pred_region
        %s309 = ssub.s32 %s14, 2
        // Predicated region
        $region45: #{tpu_custom_call.1} parent=43 // pred_check
          %p310 = pneg %p90
        $region46: #{tpu_custom_call.1} parent=43 // pred_check_branch
          %312 = sbr.rel (%p310) target = $region48
        $region47: #{tpu_custom_call.1} parent=43 // pred_region
          %s313 = sand.u32 %s75, 1
          %s314 = scalar_lea.sflag [#allocation3], %s313
          %s315 = sand.u32 %s75, 1
          %s316 = smul.addr %s315, 4
          %s317 = scalar_lea.vmem [#allocation5], %s316
          %318 = dma.done %s314, 64
        $region48: #{tpu_custom_call.1} parent=43 // pred_fallthru
          _
        // Predicated region
        $region49: #{tpu_custom_call.1} parent=43 // pred_check
          %p319 = pneg %p116
        $region50: #{tpu_custom_call.1} parent=43 // pred_check_branch
          %321 = sbr.rel (%p319) target = $region52
        $region51: #{tpu_custom_call.1} parent=43 // pred_region
          %p322 = scmp.lt.s32.totalorder %s20, 1
          %s323 = scalar_select %p322, %s20, 1
          %s324 = smul.addr %s323, 4
          %s325 = scalar_lea.vmem %s3, %s324
        $region52: #{tpu_custom_call.1} parent=43 // pred_fallthru
          _
      $region44: #{tpu_custom_call.1} parent=5 // pred_fallthru
        _
    $region6: #{tpu_custom_call.1} parent=1 // loop_footer
      %s18 = sadd.s32 1, %s14
    $region7: #{tpu_custom_call.1} parent=1 // loop_footer_branch
      %13 = sbr.rel target = $region3
    $region8: #{tpu_custom_call.1} parent=1 // loop_exit
      _
    %326 = vsyncpa [#allocation3], 1
    %s327 = scalar_lea.sflag [#allocation3], 1
    %328 = vsyncpa %s327, 1
    %329 = vsyncpa [#allocation4], 1
    %s330 = scalar_lea.sflag [#allocation4], 1
    %331 = vsyncpa %s330, 1

</llo_original>
